<compile_context>
chip_gen: v5e
topology: v5e:2x2
jax: 0.10.0
libtpu: 0.0.40
codegen_flags: <defaults>
</compile_context>

<pallas_src>
import functools

import jax
import jax.numpy as jnp
from jax.experimental import pallas as pl
from jax.experimental.pallas import tpu as pltpu


LANE = 128  # lane width / feature-dim padding granularity


def _round_up(n, m):
    return ((n + m - 1) // m) * m


# ---------------------------------------------------------------------------
# Kernel
# ---------------------------------------------------------------------------
def dec_kernel(mu_ref, sigma_ref, eps_ref,
               w1_ref, b1_ref, w2_ref, b2_ref, w3_ref, b3_ref,
               out_ref):
    # Reparameterization in f32 (VPU).
    x = mu_ref[...] + sigma_ref[...] * eps_ref[...]

    # linear1 + ReLU : bf16 operands -> MXU, f32 accumulation, f32 epilogue.
    h1 = jnp.dot(x.astype(jnp.bfloat16), w1_ref[...],
                 preferred_element_type=jnp.float32) + b1_ref[...]
    h1 = jnp.maximum(h1, 0.0)

    # linear2 + ReLU
    h2 = jnp.dot(h1.astype(jnp.bfloat16), w2_ref[...],
                 preferred_element_type=jnp.float32) + b2_ref[...]
    h2 = jnp.maximum(h2, 0.0)

    # linear_out
    y = jnp.dot(h2.astype(jnp.bfloat16), w3_ref[...],
                preferred_element_type=jnp.float32) + b3_ref[...]

    # clamp(1e-6, 1 - 1e-6) — lane-dense store (out dim padded to 128).
    out_ref[...] = jnp.clip(y, 1e-6, 1.0 - 1e-6).astype(out_ref.dtype)


# ---------------------------------------------------------------------------
# Parameter handling
# ---------------------------------------------------------------------------
def init_dec_params(key, in_dim, hidden_dim, out_dim):
    """Logical-shape f32 params, mimicking nn.Linear default init.

    Weights are stored as (fan_in, fan_out) so the kernel computes y = x @ W + b.
    """
    ks = jax.random.split(key, 6)

    def lin(kw, kb, fan_in, fan_out):
        bound = 1.0 / jnp.sqrt(fan_in)
        w = jax.random.uniform(kw, (fan_in, fan_out), jnp.float32, -bound, bound)
        b = jax.random.uniform(kb, (1, fan_out), jnp.float32, -bound, bound)
        return w, b

    w1, b1 = lin(ks[0], ks[1], in_dim, hidden_dim)
    w2, b2 = lin(ks[2], ks[3], hidden_dim, hidden_dim * 2)
    w3, b3 = lin(ks[4], ks[5], hidden_dim * 2, out_dim)
    return (w1, b1, w2, b2, w3, b3)


def prepare_dec_params(params):
    """Zero-pad every feature dim up to a multiple of 128 and cast weights to bf16.

    Zero padding is exact: padded input features hit zero weight rows, padded hidden
    columns get bias 0 and stay 0 through ReLU, padded output columns are sliced off
    in the wrapper.  Biases stay f32 (added on the f32 accumulator).
    """
    w1, b1, w2, b2, w3, b3 = params

    def prep(w, b):
        kin = _round_up(w.shape[0], LANE)
        kout = _round_up(w.shape[1], LANE)
        wp = jnp.zeros((kin, kout), jnp.float32).at[:w.shape[0], :w.shape[1]].set(w)
        bp = jnp.zeros((1, kout), jnp.float32).at[:, :b.shape[1]].set(b)
        return wp.astype(jnp.bfloat16), bp

    w1p, b1p = prep(w1, b1)
    w2p, b2p = prep(w2, b2)
    w3p, b3p = prep(w3, b3)
    return (w1p, b1p, w2p, b2p, w3p, b3p)


# ---------------------------------------------------------------------------
# Wrapper
# ---------------------------------------------------------------------------
def dec_forward(mu, sigma, eps, padded_params, *, out_dim, block_b=128):
    """Full DEC forward as a single batch-gridded pallas_call.

    mu/sigma/eps : (B, in_dim) f32.  padded_params from prepare_dec_params().
    """
    w1, b1, w2, b2, w3, b3 = padded_params
    B, in_dim = mu.shape

    in_p = w1.shape[0]
    h_p = w1.shape[1]
    h2_p = w2.shape[1]
    out_p = w3.shape[1]

    tb = block_b
    b_pad = _round_up(max(B, tb), tb)

    def pad_act(x):
        return jnp.zeros((b_pad, in_p), jnp.float32).at[:B, :in_dim].set(x)

    mu_p, sigma_p, eps_p = pad_act(mu), pad_act(sigma), pad_act(eps)

    grid = (pl.cdiv(b_pad, tb),)

    # Activation tiles march over the batch; weights/biases are grid-invariant (resident).
    act_spec = pl.BlockSpec((tb, in_p), lambda i: (i, 0))
    out_spec = pl.BlockSpec((tb, out_p), lambda i: (i, 0))

    def const_spec(arr):
        return pl.BlockSpec(arr.shape, lambda i: (0, 0))

    # Advisory cost estimate for XLA's scheduler.
    flops = 2 * b_pad * (in_p * h_p + h_p * h2_p + h2_p * out_p)
    weight_bytes = (in_p * h_p + h_p * h2_p + h2_p * out_p) * 2 \
        + (h_p + h2_p + out_p) * 4
    bytes_accessed = weight_bytes + 3 * b_pad * in_p * 4 + b_pad * out_p * 4
    cost = pl.CostEstimate(flops=flops, transcendentals=0,
                           bytes_accessed=bytes_accessed)

    # VMEM budget: resident weights + double-buffered activation tiles + headroom.
    vmem_needed = (
        2 * weight_bytes                                   # weights/biases (double-buffer worst case)
        + 2 * (3 * tb * in_p + tb * out_p) * 4             # pipelined in/out tiles
        + 4 * tb * max(h_p, h2_p) * 4                      # intermediate activations
    )
    vmem_limit = int(min(48 << 20, max(16 << 20, 2 * vmem_needed)))

    out_padded = pl.pallas_call(
        dec_kernel,
        out_shape=jax.ShapeDtypeStruct((b_pad, out_p), jnp.float32),
        grid=grid,
        in_specs=[act_spec, act_spec, act_spec,
                  const_spec(w1), const_spec(b1),
                  const_spec(w2), const_spec(b2),
                  const_spec(w3), const_spec(b3)],
        out_specs=out_spec,
        compiler_params=pltpu.CompilerParams(
            dimension_semantics=("parallel",),
            vmem_limit_bytes=vmem_limit,
        ),
        cost_estimate=cost,
    )(mu_p, sigma_p, eps_p, w1, b1, w2, b2, w3, b3)

    return out_padded[:B, :out_dim]


# ---------------------------------------------------------------------------
# Pure-JAX reference (matches kernel numerics: bf16 matmul operands, f32 accum)
# ---------------------------------------------------------------------------
def dec_reference(mu, sigma, eps, params):
    w1, b1, w2, b2, w3, b3 = params
    bf = jnp.bfloat16
    x = mu + sigma * eps
    h1 = jnp.maximum(
        jnp.dot(x.astype(bf), w1.astype(bf), preferred_element_type=jnp.float32) + b1, 0.0)
    h2 = jnp.maximum(
        jnp.dot(h1.astype(bf), w2.astype(bf), preferred_element_type=jnp.float32) + b2, 0.0)
    y = jnp.dot(h2.astype(bf), w3.astype(bf), preferred_element_type=jnp.float32) + b3
    return jnp.clip(y, 1e-6, 1.0 - 1e-6)


if __name__ == "__main__":
    # Small shapes consistent with the module; B deliberately not a multiple of the
    # batch tile so the padding / multi-step grid path is exercised.
    B, in_dim, hidden_dim, out_dim = 200, 32, 32, 16

    key = jax.random.PRNGKey(0)
    k_mu, k_sigma, k_eps, k_params = jax.random.split(key, 4)

    mu = jax.random.normal(k_mu, (B, in_dim), jnp.float32)
    sigma = jax.nn.softplus(jax.random.normal(k_sigma, (B, in_dim), jnp.float32))
    # eps drawn outside the kernel (deterministic); replaces torch normal.Normal(0,1).sample
    eps = jax.random.normal(k_eps, (B, in_dim), jnp.float32)

    params = init_dec_params(k_params, in_dim, hidden_dim, out_dim)
    padded_params = prepare_dec_params(params)

    out = dec_forward(mu, sigma, eps, padded_params, out_dim=out_dim, block_b=128)
    out = jax.block_until_ready(out)

    ref = dec_reference(mu, sigma, eps, params)
    assert out.shape == (B, out_dim), out.shape
    assert jnp.allclose(out, ref, atol=1e-3, rtol=1e-3), "mismatch vs. reference"

    # TODO(synk): original forward clamps raw logits (no sigmoid) — reproduced as-is per spec.
    print("KERNEL_OK")
</pallas_src>

<mosaic_0001>
module attributes {stable_mosaic.version = 11 : i64} {
  func.func @dec_kernel(%arg0: i32, %arg1: memref<128x128xf32, #tpu.memory_space<vmem>>, %arg2: memref<128x128xf32, #tpu.memory_space<vmem>>, %arg3: memref<128x128xf32, #tpu.memory_space<vmem>>, %arg4: memref<128x128xbf16, #tpu.memory_space<vmem>>, %arg5: memref<1x128xf32, #tpu.memory_space<vmem>>, %arg6: memref<128x128xbf16, #tpu.memory_space<vmem>>, %arg7: memref<1x128xf32, #tpu.memory_space<vmem>>, %arg8: memref<128x128xbf16, #tpu.memory_space<vmem>>, %arg9: memref<1x128xf32, #tpu.memory_space<vmem>>, %arg10: memref<128x128xf32, #tpu.memory_space<vmem>>) attributes {dimension_semantics = [#tpu.dimension_semantics<parallel>], iteration_bounds = array<i64: 2>, scalar_prefetch = 0 : i64, scratch_operands = 0 : i64, tpu.core_type = #tpu.core_type<tc>, window_params = [{transform_indices = @transform_0, window_bounds = array<i64: 128, 128>}, {transform_indices = @transform_1, window_bounds = array<i64: 128, 128>}, {transform_indices = @transform_2, window_bounds = array<i64: 128, 128>}, {pipeline_mode = #tpu.pipeline_mode<synchronous>, transform_indices = @transform_3, window_bounds = array<i64: 128, 128>}, {pipeline_mode = #tpu.pipeline_mode<synchronous>, transform_indices = @transform_4, window_bounds = array<i64: 1, 128>}, {pipeline_mode = #tpu.pipeline_mode<synchronous>, transform_indices = @transform_5, window_bounds = array<i64: 128, 128>}, {pipeline_mode = #tpu.pipeline_mode<synchronous>, transform_indices = @transform_6, window_bounds = array<i64: 1, 128>}, {pipeline_mode = #tpu.pipeline_mode<synchronous>, transform_indices = @transform_7, window_bounds = array<i64: 128, 128>}, {pipeline_mode = #tpu.pipeline_mode<synchronous>, transform_indices = @transform_8, window_bounds = array<i64: 1, 128>}, {transform_indices = @transform_9, window_bounds = array<i64: 128, 128>}]} {
    %c0 = arith.constant 0 : index
    %c0_0 = arith.constant 0 : index
    %0 = vector.load %arg1[%c0, %c0_0] : memref<128x128xf32, #tpu.memory_space<vmem>>, vector<128x128xf32>
    %c0_1 = arith.constant 0 : index
    %c0_2 = arith.constant 0 : index
    %1 = vector.load %arg2[%c0_1, %c0_2] : memref<128x128xf32, #tpu.memory_space<vmem>>, vector<128x128xf32>
    %c0_3 = arith.constant 0 : index
    %c0_4 = arith.constant 0 : index
    %2 = vector.load %arg3[%c0_3, %c0_4] : memref<128x128xf32, #tpu.memory_space<vmem>>, vector<128x128xf32>
    %3 = arith.mulf %1, %2 : vector<128x128xf32>
    %4 = arith.addf %0, %3 : vector<128x128xf32>
    %5 = arith.truncf %4 : vector<128x128xf32> to vector<128x128xbf16>
    %c0_5 = arith.constant 0 : index
    %c0_6 = arith.constant 0 : index
    %6 = vector.load %arg4[%c0_5, %c0_6] : memref<128x128xbf16, #tpu.memory_space<vmem>>, vector<128x128xbf16>
    %cst = arith.constant dense<0.000000e+00> : vector<128x128xf32>
    %7 = tpu.matmul %5, %6, %cst {dimension_numbers = #tpu.dot_dimension_numbers<[1], [0], [0], [1], [0, 0, 1, 1], [], []>} : vector<128x128xbf16>, vector<128x128xbf16>, vector<128x128xf32> -> vector<128x128xf32>
    %c0_7 = arith.constant 0 : index
    %c0_8 = arith.constant 0 : index
    %8 = vector.load %arg5[%c0_7, %c0_8] : memref<1x128xf32, #tpu.memory_space<vmem>>, vector<1x128xf32>
    %9 = vector.broadcast %8 : vector<1x128xf32> to vector<128x128xf32>
    %10 = arith.addf %7, %9 : vector<128x128xf32>
    %cst_9 = arith.constant 0.000000e+00 : f32
    %11 = vector.broadcast %cst_9 : f32 to vector<128x128xf32>
    %12 = arith.maximumf %10, %11 : vector<128x128xf32>
    %13 = arith.truncf %12 : vector<128x128xf32> to vector<128x128xbf16>
    %c0_10 = arith.constant 0 : index
    %c0_11 = arith.constant 0 : index
    %14 = vector.load %arg6[%c0_10, %c0_11] : memref<128x128xbf16, #tpu.memory_space<vmem>>, vector<128x128xbf16>
    %cst_12 = arith.constant dense<0.000000e+00> : vector<128x128xf32>
    %15 = tpu.matmul %13, %14, %cst_12 {dimension_numbers = #tpu.dot_dimension_numbers<[1], [0], [0], [1], [0, 0, 1, 1], [], []>} : vector<128x128xbf16>, vector<128x128xbf16>, vector<128x128xf32> -> vector<128x128xf32>
    %c0_13 = arith.constant 0 : index
    %c0_14 = arith.constant 0 : index
    %16 = vector.load %arg7[%c0_13, %c0_14] : memref<1x128xf32, #tpu.memory_space<vmem>>, vector<1x128xf32>
    %17 = vector.broadcast %16 : vector<1x128xf32> to vector<128x128xf32>
    %18 = arith.addf %15, %17 : vector<128x128xf32>
    %cst_15 = arith.constant 0.000000e+00 : f32
    %19 = vector.broadcast %cst_15 : f32 to vector<128x128xf32>
    %20 = arith.maximumf %18, %19 : vector<128x128xf32>
    %21 = arith.truncf %20 : vector<128x128xf32> to vector<128x128xbf16>
    %c0_16 = arith.constant 0 : index
    %c0_17 = arith.constant 0 : index
    %22 = vector.load %arg8[%c0_16, %c0_17] : memref<128x128xbf16, #tpu.memory_space<vmem>>, vector<128x128xbf16>
    %cst_18 = arith.constant dense<0.000000e+00> : vector<128x128xf32>
    %23 = tpu.matmul %21, %22, %cst_18 {dimension_numbers = #tpu.dot_dimension_numbers<[1], [0], [0], [1], [0, 0, 1, 1], [], []>} : vector<128x128xbf16>, vector<128x128xbf16>, vector<128x128xf32> -> vector<128x128xf32>
    %c0_19 = arith.constant 0 : index
    %c0_20 = arith.constant 0 : index
    %24 = vector.load %arg9[%c0_19, %c0_20] : memref<1x128xf32, #tpu.memory_space<vmem>>, vector<1x128xf32>
    %25 = vector.broadcast %24 : vector<1x128xf32> to vector<128x128xf32>
    %26 = arith.addf %23, %25 : vector<128x128xf32>
    %cst_21 = arith.constant 9.99999997E-7 : f32
    %cst_22 = arith.constant 0.999998986 : f32
    %27 = vector.broadcast %cst_21 : f32 to vector<128x128xf32>
    %28 = arith.maximumf %27, %26 : vector<128x128xf32>
    %29 = vector.broadcast %cst_22 : f32 to vector<128x128xf32>
    %30 = arith.minimumf %29, %28 : vector<128x128xf32>
    %c0_23 = arith.constant 0 : index
    %c0_24 = arith.constant 0 : index
    %31 = vector.load %arg10[%c0_23, %c0_24] : memref<128x128xf32, #tpu.memory_space<vmem>>, vector<128x128xf32>
    tpu.vector_store %arg10[%c0_23, %c0_24], %30 {strides = array<i32>} : memref<128x128xf32, #tpu.memory_space<vmem>>, vector<128x128xf32>,
    return
  }
  func.func @transform_0(%arg0: i32) -> (i32, i32) {
    %c0_i32 = arith.constant 0 : i32
    %c0_i32_0 = arith.constant 0 : i32
    return %arg0, %c0_i32 : i32, i32
  }
  func.func @transform_1(%arg0: i32) -> (i32, i32) {
    %c0_i32 = arith.constant 0 : i32
    %c0_i32_0 = arith.constant 0 : i32
    return %arg0, %c0_i32 : i32, i32
  }
  func.func @transform_2(%arg0: i32) -> (i32, i32) {
    %c0_i32 = arith.constant 0 : i32
    %c0_i32_0 = arith.constant 0 : i32
    return %arg0, %c0_i32 : i32, i32
  }
  func.func @transform_3(%arg0: i32) -> (i32, i32) {
    %c0_i32 = arith.constant 0 : i32
    %c0_i32_0 = arith.constant 0 : i32
    %c0_i32_1 = arith.constant 0 : i32
    return %c0_i32, %c0_i32_0 : i32, i32
  }
  func.func @transform_4(%arg0: i32) -> (i32, i32) {
    %c0_i32 = arith.constant 0 : i32
    %c0_i32_0 = arith.constant 0 : i32
    %c0_i32_1 = arith.constant 0 : i32
    return %c0_i32, %c0_i32_0 : i32, i32
  }
  func.func @transform_5(%arg0: i32) -> (i32, i32) {
    %c0_i32 = arith.constant 0 : i32
    %c0_i32_0 = arith.constant 0 : i32
    %c0_i32_1 = arith.constant 0 : i32
    return %c0_i32, %c0_i32_0 : i32, i32
  }
  func.func @transform_6(%arg0: i32) -> (i32, i32) {
    %c0_i32 = arith.constant 0 : i32
    %c0_i32_0 = arith.constant 0 : i32
    %c0_i32_1 = arith.constant 0 : i32
    return %c0_i32, %c0_i32_0 : i32, i32
  }
  func.func @transform_7(%arg0: i32) -> (i32, i32) {
    %c0_i32 = arith.constant 0 : i32
    %c0_i32_0 = arith.constant 0 : i32
    %c0_i32_1 = arith.constant 0 : i32
    return %c0_i32, %c0_i32_0 : i32, i32
  }
  func.func @transform_8(%arg0: i32) -> (i32, i32) {
    %c0_i32 = arith.constant 0 : i32
    %c0_i32_0 = arith.constant 0 : i32
    %c0_i32_1 = arith.constant 0 : i32
    return %c0_i32, %c0_i32_0 : i32, i32
  }
  func.func @transform_9(%arg0: i32) -> (i32, i32) {
    %c0_i32 = arith.constant 0 : i32
    %c0_i32_0 = arith.constant 0 : i32
    return %arg0, %c0_i32 : i32, i32
  }
}

</mosaic_0001>

<llo_original>
// kernel: tpu_custom_call.1
$region0: #{tpu_custom_call.1}
  #allocation0 [shape = 'u32[]', space=smem, size = 0x4, offset = 0x4, fixed_abs, tag = 'smem constant byte address 0x4 - core index']
  #allocation1 [shape = 'u32[72,128]{1,0:T(1,128)}', space=vmem, size = 0x9000, scoped, tag = 'internal scratch']
  %s0 = inlined_call_operand.hbm [shape: f32[256,128], index: 0, kind: input, shape index: {}]
  %s1 = inlined_call_operand.hbm [shape: f32[256,128], index: 1, kind: input, shape index: {}]
  %s2 = inlined_call_operand.hbm [shape: f32[256,128], index: 2, kind: input, shape index: {}]
  %s3 = inlined_call_operand.hbm [shape: bf16[128,128], index: 3, kind: input, shape index: {}]
  %s4 = inlined_call_operand.vmem [shape: f32[1,128], index: 4, kind: input, shape index: {}]
  %s5 = inlined_call_operand.hbm [shape: bf16[128,128], index: 5, kind: input, shape index: {}]
  %s6 = inlined_call_operand.vmem [shape: f32[1,128], index: 6, kind: input, shape index: {}]
  %s7 = inlined_call_operand.hbm [shape: bf16[128,128], index: 7, kind: input, shape index: {}]
  %s8 = inlined_call_operand.vmem [shape: f32[1,128], index: 8, kind: input, shape index: {}]
  %s9 = inlined_call_operand.hbm [shape: f32[256,128], index: 9, kind: output, shape index: {}]
  %s10 = sld [smem:[#allocation0]]
  $region93: #{tpu_custom_call.1} parent=0
    _
  %s12 = ssub.s32 1, %s10
  %s13 = scalar_select 0, %s12, %s10
  $region1: #{tpu_custom_call.1} parent=0
    #allocation2 [shape = 'u8[131072]{0}', space=vmem, size = 0x20000, scoped, tag = 'input window, operand 0']
    #allocation3 [shape = 's32[2]{0}', space=sflag, size = 0x8, scoped, tag = 'scoped memory for tpu_custom_call.1']
    #allocation4 [shape = 's32[2]{0}', space=sflag, size = 0x8, scoped, tag = 'scoped memory for tpu_custom_call.1']
    #allocation5 [shape = 'u8[131072]{0}', space=vmem, size = 0x20000, scoped, tag = 'input window, operand 1']
    #allocation6 [shape = 's32[2]{0}', space=sflag, size = 0x8, scoped, tag = 'scoped memory for tpu_custom_call.1']
    #allocation7 [shape = 'u8[131072]{0}', space=vmem, size = 0x20000, scoped, tag = 'input window, operand 2']
    #allocation8 [shape = 'u8[32768]{0}', space=vmem, size = 0x8000, scoped, tag = 'input window, operand 3, single buffered']
    #allocation9 [shape = 's32[1]{0}', space=sflag, size = 0x4, scoped, tag = 'scoped memory for tpu_custom_call.1']
    #allocation10 [shape = 'u8[32768]{0}', space=vmem, size = 0x8000, scoped, tag = 'input window, operand 5, single buffered']
    #allocation11 [shape = 'u8[32768]{0}', space=vmem, size = 0x8000, scoped, tag = 'input window, operand 7, single buffered']
    #allocation12 [shape = 's32[1]{0}', space=sflag, size = 0x4, scoped, tag = 'scoped memory for tpu_custom_call.1']
    #allocation13 [shape = 'u8[131072]{0}', space=vmem, size = 0x20000, scoped, tag = 'output window, operand 0']
    %14 = vsyncpa [#allocation3], 0
    %s15 = scalar_lea.sflag [#allocation3], 1
    %16 = vsyncpa %s15, 0
    %17 = vsyncpa [#allocation6], 0
    %s18 = scalar_lea.sflag [#allocation6], 1
    %19 = vsyncpa %s18, 0
    %20 = vsyncpa [#allocation9], 0
    %21 = vsyncpa [#allocation12], 0
    %22 = vsyncpa [#allocation4], 0
    %s23 = scalar_lea.sflag [#allocation4], 1
    %24 = vsyncpa %s23, 0
    loop: start=0, step=1, limit=4
    $region2: #{tpu_custom_call.1} parent=1 // loop_pre_header
      _
    $region3: #{tpu_custom_call.1} parent=1 // loop_header
      %s26 = sphi 0, %s30
      %p27 = scmp.ge.s32.totalorder %s26, 4
      %s36 = sphi 0, %s38
      %s39 = sphi 0, %s36
      %s40 = sphi 0, %s39
      %s56 = sphi 0, %s40
      %s62 = sphi 0, %s64
      %s65 = sphi 0, %s62
      %s66 = sphi 0, %s65
      %s82 = sphi 0, %s66
      %s88 = sphi 0, %s90
      %s91 = sphi 0, %s88
      %s92 = sphi 0, %s91
      %s108 = sphi 0, %s92
      %s112 = sphi 0, %s112
      %s114 = sphi 0, %s112
      %s115 = sphi 0, %s114
      %s129 = sphi 0, %s115
      %s133 = sphi 0, %s133
      %s135 = sphi 0, %s133
      %s136 = sphi 0, %s135
      %s150 = sphi 0, %s136
      %s154 = sphi 0, %s154
      %s156 = sphi 0, %s154
      %s157 = sphi 0, %s156
      %s171 = sphi 0, %s157
      %s175 = sphi 0, %s175
      %s177 = sphi 0, %s175
      %s178 = sphi 0, %s177
      %s192 = sphi 0, %s178
      %s196 = sphi 0, %s196
      %s198 = sphi 0, %s196
      %s199 = sphi 0, %s198
      %s213 = sphi 0, %s199
      %s217 = sphi 0, %s217
      %s219 = sphi 0, %s217
      %s220 = sphi 0, %s219
      %s234 = sphi 0, %s220
      %s240 = sphi 0, %s242
      %s243 = sphi 0, %s240
      %s244 = sphi 0, %s243
      %s260 = sphi 0, %s244
    $region4: #{tpu_custom_call.1} parent=1 // loop_header_branch
      %29 = sbr.rel (%p27) target = $region8
    $region5: #{tpu_custom_call.1} parent=1 // loop_body
      %s31 = ssub.s32 %s26, 1
      %s32 = ssub.s32 %s26, 2
      %s33 = sadd.s32 %s26, 1
      %s34 = ssub.s32 %s26, %s33
      %p35 = scmp.eq.s32.totalorder %s34, 0
      %s37 = sadd.s32 %s36, 1
      %s38 = scalar_select %p35, %s36, %s37
      %p41 = pneg %p35
      %p42 = scmp.eq.s32.totalorder %s26, 1
      %p43 = por %p41, %p42
      %p44 = scmp.ne.s32.totalorder %s36, %s39
      %p45 = scmp.eq.s32.totalorder %s26, 0
      %p46 = por %p44, %p45
      %p47 = scmp.ne.s32.totalorder %s36, %s39
      %p48 = scmp.eq.s32.totalorder %s31, 1
      %p49 = por %p47, %p48
      %p50 = scmp.ne.s32.totalorder %s39, %s40
      %p51 = scmp.eq.s32.totalorder %s31, 0
      %p52 = por %p50, %p51
      %p53 = scmp.ne.s32.totalorder %s39, %s40
      %p54 = scmp.eq.s32.totalorder %s32, 1
      %p55 = por %p53, %p54
      %p57 = scmp.ne.s32.totalorder %s40, %s56
      %p58 = scmp.eq.s32.totalorder %s32, 0
      %p59 = por %p57, %p58
      %s60 = ssub.s32 %s26, %s33
      %p61 = scmp.eq.s32.totalorder %s60, 0
      %s63 = sadd.s32 %s62, 1
      %s64 = scalar_select %p61, %s62, %s63
      %p67 = pneg %p61
      %p68 = scmp.eq.s32.totalorder %s26, 1
      %p69 = por %p67, %p68
      %p70 = scmp.ne.s32.totalorder %s62, %s65
      %p71 = scmp.eq.s32.totalorder %s26, 0
      %p72 = por %p70, %p71
      %p73 = scmp.ne.s32.totalorder %s62, %s65
      %p74 = scmp.eq.s32.totalorder %s31, 1
      %p75 = por %p73, %p74
      %p76 = scmp.ne.s32.totalorder %s65, %s66
      %p77 = scmp.eq.s32.totalorder %s31, 0
      %p78 = por %p76, %p77
      %p79 = scmp.ne.s32.totalorder %s65, %s66
      %p80 = scmp.eq.s32.totalorder %s32, 1
      %p81 = por %p79, %p80
      %p83 = scmp.ne.s32.totalorder %s66, %s82
      %p84 = scmp.eq.s32.totalorder %s32, 0
      %p85 = por %p83, %p84
      %s86 = ssub.s32 %s26, %s33
      %p87 = scmp.eq.s32.totalorder %s86, 0
      %s89 = sadd.s32 %s88, 1
      %s90 = scalar_select %p87, %s88, %s89
      %p93 = pneg %p87
      %p94 = scmp.eq.s32.totalorder %s26, 1
      %p95 = por %p93, %p94
      %p96 = scmp.ne.s32.totalorder %s88, %s91
      %p97 = scmp.eq.s32.totalorder %s26, 0
      %p98 = por %p96, %p97
      %p99 = scmp.ne.s32.totalorder %s88, %s91
      %p100 = scmp.eq.s32.totalorder %s31, 1
      %p101 = por %p99, %p100
      %p102 = scmp.ne.s32.totalorder %s91, %s92
      %p103 = scmp.eq.s32.totalorder %s31, 0
      %p104 = por %p102, %p103
      %p105 = scmp.ne.s32.totalorder %s91, %s92
      %p106 = scmp.eq.s32.totalorder %s32, 1
      %p107 = por %p105, %p106
      %p109 = scmp.ne.s32.totalorder %s92, %s108
      %p110 = scmp.eq.s32.totalorder %s32, 0
      %p111 = por %p109, %p110
      %s113 = sadd.s32 %s112, 1
      %p116 = scmp.eq.s32.totalorder %s26, 1
      %p117 = scmp.ne.s32.totalorder %s112, %s114
      %p118 = scmp.eq.s32.totalorder %s26, 0
      %p119 = por %p117, %p118
      %p120 = scmp.ne.s32.totalorder %s112, %s114
      %p121 = scmp.eq.s32.totalorder %s31, 1
      %p122 = por %p120, %p121
      %p123 = scmp.ne.s32.totalorder %s114, %s115
      %p124 = scmp.eq.s32.totalorder %s31, 0
      %p125 = por %p123, %p124
      %p126 = scmp.ne.s32.totalorder %s114, %s115
      %p127 = scmp.eq.s32.totalorder %s32, 1
      %p128 = por %p126, %p127
      %p130 = scmp.ne.s32.totalorder %s115, %s129
      %p131 = scmp.eq.s32.totalorder %s32, 0
      %p132 = por %p130, %p131
      %s134 = sadd.s32 %s133, 1
      %p137 = scmp.eq.s32.totalorder %s26, 1
      %p138 = scmp.ne.s32.totalorder %s133, %s135
      %p139 = scmp.eq.s32.totalorder %s26, 0
      %p140 = por %p138, %p139
      %p141 = scmp.ne.s32.totalorder %s133, %s135
      %p142 = scmp.eq.s32.totalorder %s31, 1
      %p143 = por %p141, %p142
      %p144 = scmp.ne.s32.totalorder %s135, %s136
      %p145 = scmp.eq.s32.totalorder %s31, 0
      %p146 = por %p144, %p145
      %p147 = scmp.ne.s32.totalorder %s135, %s136
      %p148 = scmp.eq.s32.totalorder %s32, 1
      %p149 = por %p147, %p148
      %p151 = scmp.ne.s32.totalorder %s136, %s150
      %p152 = scmp.eq.s32.totalorder %s32, 0
      %p153 = por %p151, %p152
      %s155 = sadd.s32 %s154, 1
      %p158 = scmp.eq.s32.totalorder %s26, 1
      %p159 = scmp.ne.s32.totalorder %s154, %s156
      %p160 = scmp.eq.s32.totalorder %s26, 0
      %p161 = por %p159, %p160
      %p162 = scmp.ne.s32.totalorder %s154, %s156
      %p163 = scmp.eq.s32.totalorder %s31, 1
      %p164 = por %p162, %p163
      %p165 = scmp.ne.s32.totalorder %s156, %s157
      %p166 = scmp.eq.s32.totalorder %s31, 0
      %p167 = por %p165, %p166
      %p168 = scmp.ne.s32.totalorder %s156, %s157
      %p169 = scmp.eq.s32.totalorder %s32, 1
      %p170 = por %p168, %p169
      %p172 = scmp.ne.s32.totalorder %s157, %s171
      %p173 = scmp.eq.s32.totalorder %s32, 0
      %p174 = por %p172, %p173
      %s176 = sadd.s32 %s175, 1
      %p179 = scmp.eq.s32.totalorder %s26, 1
      %p180 = scmp.ne.s32.totalorder %s175, %s177
      %p181 = scmp.eq.s32.totalorder %s26, 0
      %p182 = por %p180, %p181
      %p183 = scmp.ne.s32.totalorder %s175, %s177
      %p184 = scmp.eq.s32.totalorder %s31, 1
      %p185 = por %p183, %p184
      %p186 = scmp.ne.s32.totalorder %s177, %s178
      %p187 = scmp.eq.s32.totalorder %s31, 0
      %p188 = por %p186, %p187
      %p189 = scmp.ne.s32.totalorder %s177, %s178
      %p190 = scmp.eq.s32.totalorder %s32, 1
      %p191 = por %p189, %p190
      %p193 = scmp.ne.s32.totalorder %s178, %s192
      %p194 = scmp.eq.s32.totalorder %s32, 0
      %p195 = por %p193, %p194
      %s197 = sadd.s32 %s196, 1
      %p200 = scmp.eq.s32.totalorder %s26, 1
      %p201 = scmp.ne.s32.totalorder %s196, %s198
      %p202 = scmp.eq.s32.totalorder %s26, 0
      %p203 = por %p201, %p202
      %p204 = scmp.ne.s32.totalorder %s196, %s198
      %p205 = scmp.eq.s32.totalorder %s31, 1
      %p206 = por %p204, %p205
      %p207 = scmp.ne.s32.totalorder %s198, %s199
      %p208 = scmp.eq.s32.totalorder %s31, 0
      %p209 = por %p207, %p208
      %p210 = scmp.ne.s32.totalorder %s198, %s199
      %p211 = scmp.eq.s32.totalorder %s32, 1
      %p212 = por %p210, %p211
      %p214 = scmp.ne.s32.totalorder %s199, %s213
      %p215 = scmp.eq.s32.totalorder %s32, 0
      %p216 = por %p214, %p215
      %s218 = sadd.s32 %s217, 1
      %p221 = scmp.eq.s32.totalorder %s26, 1
      %p222 = scmp.ne.s32.totalorder %s217, %s219
      %p223 = scmp.eq.s32.totalorder %s26, 0
      %p224 = por %p222, %p223
      %p225 = scmp.ne.s32.totalorder %s217, %s219
      %p226 = scmp.eq.s32.totalorder %s31, 1
      %p227 = por %p225, %p226
      %p228 = scmp.ne.s32.totalorder %s219, %s220
      %p229 = scmp.eq.s32.totalorder %s31, 0
      %p230 = por %p228, %p229
      %p231 = scmp.ne.s32.totalorder %s219, %s220
      %p232 = scmp.eq.s32.totalorder %s32, 1
      %p233 = por %p231, %p232
      %p235 = scmp.ne.s32.totalorder %s220, %s234
      %p236 = scmp.eq.s32.totalorder %s32, 0
      %p237 = por %p235, %p236
      %s238 = ssub.s32 %s26, %s33
      %p239 = scmp.eq.s32.totalorder %s238, 0
      %s241 = sadd.s32 %s240, 1
      %s242 = scalar_select %p239, %s240, %s241
      %p245 = pneg %p239
      %p246 = scmp.eq.s32.totalorder %s26, 1
      %p247 = por %p245, %p246
      %p248 = scmp.ne.s32.totalorder %s240, %s243
      %p249 = scmp.eq.s32.totalorder %s26, 0
      %p250 = por %p248, %p249
      %p251 = scmp.ne.s32.totalorder %s240, %s243
      %p252 = scmp.eq.s32.totalorder %s31, 1
      %p253 = por %p251, %p252
      %p254 = scmp.ne.s32.totalorder %s243, %s244
      %p255 = scmp.eq.s32.totalorder %s31, 0
      %p256 = por %p254, %p255
      %p257 = scmp.ne.s32.totalorder %s243, %s244
      %p258 = scmp.eq.s32.totalorder %s32, 1
      %p259 = por %p257, %p258
      %p261 = scmp.ne.s32.totalorder %s244, %s260
      %p262 = scmp.eq.s32.totalorder %s32, 0
      %p263 = por %p261, %p262
      %p264 = scmp.le.s32.totalorder 1, %s26
      %p265 = scmp.lt.s32.totalorder %s26, 3
      %p266 = pnand %p264, %p265
      %p267 = pneg %p266
      // Predicated region
      $region9: #{tpu_custom_call.1} parent=5 // pred_check
        _
      $region10: #{tpu_custom_call.1} parent=5 // pred_check_branch
        %269 = sbr.rel (%p266) target = $region12
      $region11: #{tpu_custom_call.1} parent=5 // pred_region
        %s270 = ssub.s32 %s26, 1
        // Predicated region
        $region13: #{tpu_custom_call.1} parent=11 // pred_check
          %p271 = pneg %p125
        $region14: #{tpu_custom_call.1} parent=11 // pred_check_branch
          %273 = sbr.rel (%p271) target = $region16
        $region15: #{tpu_custom_call.1} parent=11 // pred_region
          %275 = vsyncadd [#allocation9], 0
          %s276 = sshll.u32 %s3, 4
          %s277 = int_to_ptr.hbm [resolvable:$true] %s276
          %s278 = sshll.u32 [#allocation8], 4
          %s279 = int_to_ptr.vmem [resolvable:$true] %s278
          %284 = dma.hbm_to_vmem [thread:$0]  %s277, 1024, %s279, [#allocation9], 64, 64, 4
        $region16: #{tpu_custom_call.1} parent=11 // pred_fallthru
          _
        // Predicated region
        $region17: #{tpu_custom_call.1} parent=11 // pred_check
          %p285 = pneg %p146
        $region18: #{tpu_custom_call.1} parent=11 // pred_check_branch
          %287 = sbr.rel (%p285) target = $region20
        $region19: #{tpu_custom_call.1} parent=11 // pred_region
          _
        $region20: #{tpu_custom_call.1} parent=11 // pred_fallthru
          _
        // Predicated region
        $region21: #{tpu_custom_call.1} parent=11 // pred_check
          %p288 = pneg %p167
        $region22: #{tpu_custom_call.1} parent=11 // pred_check_branch
          %290 = sbr.rel (%p288) target = $region24
        $region23: #{tpu_custom_call.1} parent=11 // pred_region
          %292 = vsyncadd [#allocation9], 0
          %s293 = sshll.u32 %s5, 4
          %s294 = int_to_ptr.hbm [resolvable:$true] %s293
          %s295 = sshll.u32 [#allocation10], 4
          %s296 = int_to_ptr.vmem [resolvable:$true] %s295
          %301 = dma.hbm_to_vmem [thread:$0]  %s294, 1024, %s296, [#allocation9], 64, 64, 4
        $region24: #{tpu_custom_call.1} parent=11 // pred_fallthru
          _
        // Predicated region
        $region25: #{tpu_custom_call.1} parent=11 // pred_check
          %p302 = pneg %p188
        $region26: #{tpu_custom_call.1} parent=11 // pred_check_branch
          %304 = sbr.rel (%p302) target = $region28
        $region27: #{tpu_custom_call.1} parent=11 // pred_region
          _
        $region28: #{tpu_custom_call.1} parent=11 // pred_fallthru
          _
        // Predicated region
        $region29: #{tpu_custom_call.1} parent=11 // pred_check
          %p305 = pneg %p209
        $region30: #{tpu_custom_call.1} parent=11 // pred_check_branch
          %307 = sbr.rel (%p305) target = $region32
        $region31: #{tpu_custom_call.1} parent=11 // pred_region
          %309 = vsyncadd [#allocation12], 0
          %s310 = sshll.u32 %s7, 4
          %s311 = int_to_ptr.hbm [resolvable:$true] %s310
          %s312 = sshll.u32 [#allocation11], 4
          %s313 = int_to_ptr.vmem [resolvable:$true] %s312
          %318 = dma.hbm_to_vmem [thread:$0]  %s311, 1024, %s313, [#allocation12], 64, 64, 4
        $region32: #{tpu_custom_call.1} parent=11 // pred_fallthru
          _
        // Predicated region
        $region33: #{tpu_custom_call.1} parent=11 // pred_check
          %p319 = pneg %p230
        $region34: #{tpu_custom_call.1} parent=11 // pred_check_branch
          %321 = sbr.rel (%p319) target = $region36
        $region35: #{tpu_custom_call.1} parent=11 // pred_region
          _
        $region36: #{tpu_custom_call.1} parent=11 // pred_fallthru
          _
      $region12: #{tpu_custom_call.1} parent=5 // pred_fallthru
        _
      %p322 = scmp.lt.s32.totalorder %s26, 2
      // Predicated region
      $region37: #{tpu_custom_call.1} parent=5 // pred_check
        %p323 = pneg %p322
      $region38: #{tpu_custom_call.1} parent=5 // pred_check_branch
        %325 = sbr.rel (%p323) target = $region40
      $region39: #{tpu_custom_call.1} parent=5 // pred_region
        // Predicated region
        $region41: #{tpu_custom_call.1} parent=39 // pred_check
          %p326 = pneg %p46
        $region42: #{tpu_custom_call.1} parent=39 // pred_check_branch
          %328 = sbr.rel (%p326) target = $region44
        $region43: #{tpu_custom_call.1} parent=39 // pred_region
          %s329 = sand.u32 %s36, 1
          %s330 = scalar_lea.sflag [#allocation3], %s329
          %s331 = sand.u32 %s36, 1
          %s332 = smul.addr %s331, 128
          %s333 = scalar_lea.vmem [#allocation2], %s332
          %s334 = smul.u32 16, %s26
          %336 = vsyncadd %s330, 0
          %s337 = smul.addr %s334, 8
          %s338 = scalar_lea.hbm %s0, %s337
          %s339 = sshll.u32 %s338, 4
          %s340 = int_to_ptr.hbm [resolvable:$true] %s339
          %s341 = sshll.u32 %s333, 4
          %s342 = int_to_ptr.vmem [resolvable:$true] %s341
          %347 = dma.hbm_to_vmem [thread:$0]  %s340, 2048, %s342, %s330, 128, 128, 8
        $region44: #{tpu_custom_call.1} parent=39 // pred_fallthru
          _
        // Predicated region
        $region45: #{tpu_custom_call.1} parent=39 // pred_check
          %p348 = pneg %p72
        $region46: #{tpu_custom_call.1} parent=39 // pred_check_branch
          %350 = sbr.rel (%p348) target = $region48
        $region47: #{tpu_custom_call.1} parent=39 // pred_region
          %s351 = sand.u32 %s26, 1
          %s352 = scalar_lea.sflag [#allocation6], %s351
          %s353 = sand.u32 %s62, 1
          %s354 = smul.addr %s353, 128
          %s355 = scalar_lea.vmem [#allocation5], %s354
          %s356 = smul.u32 16, %s26
          %358 = vsyncadd %s352, 0
          %s359 = smul.addr %s356, 8
          %s360 = scalar_lea.hbm %s1, %s359
          %s361 = sshll.u32 %s360, 4
          %s362 = int_to_ptr.hbm [resolvable:$true] %s361
          %s363 = sshll.u32 %s355, 4
          %s364 = int_to_ptr.vmem [resolvable:$true] %s363
          %369 = dma.hbm_to_vmem [thread:$0]  %s362, 2048, %s364, %s352, 128, 128, 8
        $region48: #{tpu_custom_call.1} parent=39 // pred_fallthru
          _
        // Predicated region
        $region49: #{tpu_custom_call.1} parent=39 // pred_check
          %p370 = pneg %p98
        $region50: #{tpu_custom_call.1} parent=39 // pred_check_branch
          %372 = sbr.rel (%p370) target = $region52
        $region51: #{tpu_custom_call.1} parent=39 // pred_region
          %s373 = sand.u32 %s26, 1
          %s374 = scalar_lea.sflag [#allocation6], %s373
          %s375 = sand.u32 %s88, 1
          %s376 = smul.addr %s375, 128
          %s377 = scalar_lea.vmem [#allocation7], %s376
          %s378 = smul.u32 16, %s26
          %380 = vsyncadd %s374, 0
          %s381 = smul.addr %s378, 8
          %s382 = scalar_lea.hbm %s2, %s381
          %s383 = sshll.u32 %s382, 4
          %s384 = int_to_ptr.hbm [resolvable:$true] %s383
          %s385 = sshll.u32 %s377, 4
          %s386 = int_to_ptr.vmem [resolvable:$true] %s385
          %391 = dma.hbm_to_vmem [thread:$0]  %s384, 2048, %s386, %s374, 128, 128, 8
        $region52: #{tpu_custom_call.1} parent=39 // pred_fallthru
          _
      $region40: #{tpu_custom_call.1} parent=5 // pred_fallthru
        _
      %p392 = scmp.le.s32.totalorder 1, %s26
      %p393 = scmp.lt.s32.totalorder %s26, 3
      %p394 = pnand %p392, %p393
      %p395 = pneg %p394
      // Predicated region
      $region53: #{tpu_custom_call.1} parent=5 // pred_check
        _
      $region54: #{tpu_custom_call.1} parent=5 // pred_check_branch
        %397 = sbr.rel (%p394) target = $region56
      $region55: #{tpu_custom_call.1} parent=5 // pred_region
        %s398 = ssub.s32 %s26, 1
        %s399 = sand.u32 %s39, 1
        %s400 = scalar_lea.sflag [#allocation3], %s399
        %s401 = sand.u32 %s39, 1
        %s402 = smul.addr %s401, 128
        %s403 = scalar_lea.vmem [#allocation2], %s402
        // Predicated region
        $region57: #{tpu_custom_call.1} parent=55 // pred_check
          %p404 = pneg %p52
        $region58: #{tpu_custom_call.1} parent=55 // pred_check_branch
          %406 = sbr.rel (%p404) target = $region60
        $region59: #{tpu_custom_call.1} parent=55 // pred_region
          %408 = dma.done %s400, 2048
        $region60: #{tpu_custom_call.1} parent=55 // pred_fallthru
          _
        %s409 = sand.u32 %s31, 1
        %s410 = scalar_lea.sflag [#allocation6], %s409
        %s411 = sand.u32 %s65, 1
        %s412 = smul.addr %s411, 128
        %s413 = scalar_lea.vmem [#allocation5], %s412
        // Predicated region
        $region61: #{tpu_custom_call.1} parent=55 // pred_check
          %p414 = pneg %p78
        $region62: #{tpu_custom_call.1} parent=55 // pred_check_branch
          %416 = sbr.rel (%p414) target = $region64
        $region63: #{tpu_custom_call.1} parent=55 // pred_region
          %418 = dma.done %s410, 2048
        $region64: #{tpu_custom_call.1} parent=55 // pred_fallthru
          _
        %s419 = sand.u32 %s31, 1
        %s420 = scalar_lea.sflag [#allocation6], %s419
        %s421 = sand.u32 %s91, 1
        %s422 = smul.addr %s421, 128
        %s423 = scalar_lea.vmem [#allocation7], %s422
        // Predicated region
        $region65: #{tpu_custom_call.1} parent=55 // pred_check
          %p424 = pneg %p104
        $region66: #{tpu_custom_call.1} parent=55 // pred_check_branch
          %426 = sbr.rel (%p424) target = $region68
        $region67: #{tpu_custom_call.1} parent=55 // pred_region
          %428 = dma.done %s420, 2048
        $region68: #{tpu_custom_call.1} parent=55 // pred_fallthru
          _
        // Predicated region
        $region69: #{tpu_custom_call.1} parent=55 // pred_check
          %p429 = pneg %p125
        $region70: #{tpu_custom_call.1} parent=55 // pred_check_branch
          %431 = sbr.rel (%p429) target = $region72
        $region71: #{tpu_custom_call.1} parent=55 // pred_region
          %433 = dma.done [#allocation9], 1024
        $region72: #{tpu_custom_call.1} parent=55 // pred_fallthru
          _
        // Predicated region
        $region73: #{tpu_custom_call.1} parent=55 // pred_check
          %p434 = pneg %p167
        $region74: #{tpu_custom_call.1} parent=55 // pred_check_branch
          %436 = sbr.rel (%p434) target = $region76
        $region75: #{tpu_custom_call.1} parent=55 // pred_region
          %438 = dma.done [#allocation9], 1024
        $region76: #{tpu_custom_call.1} parent=55 // pred_fallthru
          _
        // Predicated region
        $region77: #{tpu_custom_call.1} parent=55 // pred_check
          %p439 = pneg %p209
        $region78: #{tpu_custom_call.1} parent=55 // pred_check_branch
          %441 = sbr.rel (%p439) target = $region80
        $region79: #{tpu_custom_call.1} parent=55 // pred_region
          %443 = dma.done [#allocation12], 1024
        $region80: #{tpu_custom_call.1} parent=55 // pred_fallthru
          _
        %s444 = sand.u32 %s39, 1
        %s445 = scalar_lea.sflag [#allocation3], %s444
        %s446 = sand.u32 %s39, 1
        %s447 = smul.addr %s446, 128
        %s448 = scalar_lea.vmem [#allocation2], %s447
        %p449 = pneg %p52
        %p450 = pneg %p49
        %s451 = sand.u32 %s31, 1
        %s452 = scalar_lea.sflag [#allocation6], %s451
        %s453 = sand.u32 %s65, 1
        %s454 = smul.addr %s453, 128
        %s455 = scalar_lea.vmem [#allocation5], %s454
        %p456 = pneg %p78
        %p457 = pneg %p75
        %s458 = sand.u32 %s31, 1
        %s459 = scalar_lea.sflag [#allocation6], %s458
        %s460 = sand.u32 %s91, 1
        %s461 = smul.addr %s460, 128
        %s462 = scalar_lea.vmem [#allocation7], %s461
        %p463 = pneg %p104
        %p464 = pneg %p101
        %p465 = pneg %p125
        %p466 = pneg %p122
        %p467 = pneg %p146
        %p468 = pneg %p143
        %p469 = pneg %p167
        %p470 = pneg %p164
        %p471 = pneg %p188
        %p472 = pneg %p185
        %p473 = pneg %p209
        %p474 = pneg %p206
        %p475 = pneg %p230
        %p476 = pneg %p227
        %p477 = pneg %p256
        %p478 = pneg %p253
        %s479 = sand.u32 %s243, 1
        %s480 = scalar_lea.sflag [#allocation4], %s479
        %s481 = sand.u32 %s243, 1
        %s482 = smul.addr %s481, 128
        %s483 = scalar_lea.vmem [#allocation13], %s482
        %s484 = smul.u32 16, %s31
        %s485 = smul.u32 16, %s31
        %s486 = smul.u32 16, %s31
        %s487 = smul.u32 16, %s31
        %v488 = vld [vmem:[%s403] sm:$0xff]
        %v489 = vld [vmem:[%s403 + $0x8] sm:$0xff]
        %v490 = vld [vmem:[%s403 + $0x10] sm:$0xff]
        %v491 = vld [vmem:[%s403 + $0x18] sm:$0xff]
        %v492 = vld [vmem:[%s403 + $0x20] sm:$0xff]
        %v493 = vld [vmem:[%s403 + $0x28] sm:$0xff]
        %v494 = vld [vmem:[%s403 + $0x30] sm:$0xff]
        %v495 = vld [vmem:[%s403 + $0x38] sm:$0xff]
        %v496 = vld [vmem:[%s403 + $0x40] sm:$0xff]
        %v497 = vld [vmem:[%s403 + $0x48] sm:$0xff]
        %v498 = vld [vmem:[%s403 + $0x50] sm:$0xff]
        %v499 = vld [vmem:[%s403 + $0x58] sm:$0xff]
        %v500 = vld [vmem:[%s403 + $0x60] sm:$0xff]
        %v501 = vld [vmem:[%s403 + $0x68] sm:$0xff]
        %v502 = vld [vmem:[%s403 + $0x70] sm:$0xff]
        %v503 = vld [vmem:[%s403 + $0x78] sm:$0xff]
        %v504 = vld [vmem:[%s413] sm:$0xff]
        %v505 = vld [vmem:[%s413 + $0x8] sm:$0xff]
        %v506 = vld [vmem:[%s413 + $0x10] sm:$0xff]
        %v507 = vld [vmem:[%s413 + $0x18] sm:$0xff]
        %v508 = vld [vmem:[%s413 + $0x20] sm:$0xff]
        %v509 = vld [vmem:[%s413 + $0x28] sm:$0xff]
        %v510 = vld [vmem:[%s413 + $0x30] sm:$0xff]
        %v511 = vld [vmem:[%s413 + $0x38] sm:$0xff]
        %v512 = vld [vmem:[%s413 + $0x40] sm:$0xff]
        %v513 = vld [vmem:[%s413 + $0x48] sm:$0xff]
        %v514 = vld [vmem:[%s413 + $0x50] sm:$0xff]
        %v515 = vld [vmem:[%s413 + $0x58] sm:$0xff]
        %v516 = vld [vmem:[%s413 + $0x60] sm:$0xff]
        %v517 = vld [vmem:[%s413 + $0x68] sm:$0xff]
        %v518 = vld [vmem:[%s413 + $0x70] sm:$0xff]
        %v519 = vld [vmem:[%s413 + $0x78] sm:$0xff]
        %v520 = vld [vmem:[%s423] sm:$0xff]
        %v521 = vld [vmem:[%s423 + $0x8] sm:$0xff]
        %v522 = vld [vmem:[%s423 + $0x10] sm:$0xff]
        %v523 = vld [vmem:[%s423 + $0x18] sm:$0xff]
        %v524 = vld [vmem:[%s423 + $0x20] sm:$0xff]
        %v525 = vld [vmem:[%s423 + $0x28] sm:$0xff]
        %v526 = vld [vmem:[%s423 + $0x30] sm:$0xff]
        %v527 = vld [vmem:[%s423 + $0x38] sm:$0xff]
        %v528 = vld [vmem:[%s423 + $0x40] sm:$0xff]
        %v529 = vld [vmem:[%s423 + $0x48] sm:$0xff]
        %v530 = vld [vmem:[%s423 + $0x50] sm:$0xff]
        %v531 = vld [vmem:[%s423 + $0x58] sm:$0xff]
        %v532 = vld [vmem:[%s423 + $0x60] sm:$0xff]
        %v533 = vld [vmem:[%s423 + $0x68] sm:$0xff]
        %v534 = vld [vmem:[%s423 + $0x70] sm:$0xff]
        %v535 = vld [vmem:[%s423 + $0x78] sm:$0xff]
        %v536 = vmul.f32 %v504, %v520
        %v537 = vmul.f32 %v505, %v521
        %v538 = vmul.f32 %v506, %v522
        %v539 = vmul.f32 %v507, %v523
        %v540 = vmul.f32 %v508, %v524
        %v541 = vmul.f32 %v509, %v525
        %v542 = vmul.f32 %v510, %v526
        %v543 = vmul.f32 %v511, %v527
        %v544 = vmul.f32 %v512, %v528
        %v545 = vmul.f32 %v513, %v529
        %v546 = vmul.f32 %v514, %v530
        %v547 = vmul.f32 %v515, %v531
        %v548 = vmul.f32 %v516, %v532
        %v549 = vmul.f32 %v517, %v533
        %v550 = vmul.f32 %v518, %v534
        %v551 = vmul.f32 %v519, %v535
        %v552 = vadd.f32 %v488, %v536
        %v553 = vadd.f32 %v489, %v537
        %v554 = vadd.f32 %v490, %v538
        %v555 = vadd.f32 %v491, %v539
        %v556 = vadd.f32 %v492, %v540
        %v557 = vadd.f32 %v493, %v541
        %v558 = vadd.f32 %v494, %v542
        %v559 = vadd.f32 %v495, %v543
        %v560 = vadd.f32 %v496, %v544
        %v561 = vadd.f32 %v497, %v545
        %v562 = vadd.f32 %v498, %v546
        %v563 = vadd.f32 %v499, %v547
        %v564 = vadd.f32 %v500, %v548
        %v565 = vadd.f32 %v501, %v549
        %v566 = vadd.f32 %v502, %v550
        %v567 = vadd.f32 %v503, %v551
        %v568 = vpack.c.bf16 %v553, %v552
        %v569 = vpack.c.bf16 %v555, %v554
        %v570 = vpack.c.bf16 %v557, %v556
        %v571 = vpack.c.bf16 %v559, %v558
        %v572 = vpack.c.bf16 %v561, %v560
        %v573 = vpack.c.bf16 %v563, %v562
        %v574 = vpack.c.bf16 %v565, %v564
        %v575 = vpack.c.bf16 %v567, %v566
        %v576 = vld [vmem:[#allocation8] sm:$0xf]
        %v577 = vld [vmem:[#allocation8 + $0x4] sm:$0xf]
        %v578 = vld [vmem:[#allocation8 + $0x8] sm:$0xf]
        %v579 = vld [vmem:[#allocation8 + $0xc] sm:$0xf]
        %v580 = vld [vmem:[#allocation8 + $0x10] sm:$0xf]
        %v581 = vld [vmem:[#allocation8 + $0x14] sm:$0xf]
        %v582 = vld [vmem:[#allocation8 + $0x18] sm:$0xf]
        %v583 = vld [vmem:[#allocation8 + $0x1c] sm:$0xf]
        %v584 = vld [vmem:[#allocation8 + $0x20] sm:$0xf]
        %v585 = vld [vmem:[#allocation8 + $0x24] sm:$0xf]
        %v586 = vld [vmem:[#allocation8 + $0x28] sm:$0xf]
        %v587 = vld [vmem:[#allocation8 + $0x2c] sm:$0xf]
        %v588 = vld [vmem:[#allocation8 + $0x30] sm:$0xf]
        %v589 = vld [vmem:[#allocation8 + $0x34] sm:$0xf]
        %v590 = vld [vmem:[#allocation8 + $0x38] sm:$0xf]
        %v591 = vld [vmem:[#allocation8 + $0x3c] sm:$0xf]
        %v592 = vld [vmem:[%s4] sm:$0x1]
        %v594 = vperm.slane %v592, 0
        %v612 = vunpack.c.l.b16 %v576
        %v613 = vunpack.c.l.b16 %v577
        %v614 = vunpack.c.l.b16 %v578
        %v615 = vunpack.c.l.b16 %v579
        %v616 = vunpack.c.l.b16 %v580
        %v617 = vunpack.c.l.b16 %v581
        %v618 = vunpack.c.l.b16 %v582
        %v619 = vunpack.c.l.b16 %v583
        %v620 = vunpack.c.l.b16 %v584
        %v621 = vunpack.c.l.b16 %v585
        %v622 = vunpack.c.l.b16 %v586
        %v623 = vunpack.c.l.b16 %v587
        %v624 = vunpack.c.l.b16 %v588
        %v625 = vunpack.c.l.b16 %v589
        %v626 = vunpack.c.l.b16 %v590
        %v627 = vunpack.c.l.b16 %v591
        %v628 = vpack.c.b16 %v613, %v612
        %v629 = vpack.c.b16 %v615, %v614
        %v630 = vpack.c.b16 %v617, %v616
        %v631 = vpack.c.b16 %v619, %v618
        %v632 = vpack.c.b16 %v621, %v620
        %v633 = vpack.c.b16 %v623, %v622
        %v634 = vpack.c.b16 %v625, %v624
        %v635 = vpack.c.b16 %v627, %v626
        %644 = vmatpush.bf16.msra.mxu0 %v635
        %645 = vmatpush.bf16.msra.mxu0 %v634
        %646 = vmatpush.bf16.msra.mxu0 %v633
        %647 = vmatpush.bf16.msra.mxu0 %v632
        %648 = vmatpush.bf16.msra.mxu0 %v631
        %649 = vmatpush.bf16.msra.mxu0 %v630
        %650 = vmatpush.bf16.msra.mxu0 %v629
        %651 = vmatpush.bf16.msra.mxu0 %v628
        %652 = vmatmul.bf16.gmra.mxu0 %v568
        %v653 = vpop.f32.mrf.mxu0
        %v654 = vadd.f32 %v594, %v653
        %v655 = vpop.f32.mrf.mxu0
        %v656 = vadd.f32 %v594, %v655
        %657 = vmatmul.bf16.gmra.mxu0 %v569
        %v658 = vpop.f32.mrf.mxu0
        %v659 = vadd.f32 %v594, %v658
        %v660 = vpop.f32.mrf.mxu0
        %v661 = vadd.f32 %v594, %v660
        %662 = vmatmul.bf16.gmra.mxu0 %v570
        %v663 = vpop.f32.mrf.mxu0
        %v664 = vadd.f32 %v594, %v663
        %v665 = vpop.f32.mrf.mxu0
        %v666 = vadd.f32 %v594, %v665
        %667 = vmatmul.bf16.gmra.mxu0 %v571
        %v668 = vpop.f32.mrf.mxu0
        %v669 = vadd.f32 %v594, %v668
        %v670 = vpop.f32.mrf.mxu0
        %v671 = vadd.f32 %v594, %v670
        %672 = vmatmul.bf16.gmra.mxu0 %v572
        %v673 = vpop.f32.mrf.mxu0
        %v674 = vadd.f32 %v594, %v673
        %v675 = vpop.f32.mrf.mxu0
        %v676 = vadd.f32 %v594, %v675
        %677 = vmatmul.bf16.gmra.mxu0 %v573
        %v678 = vpop.f32.mrf.mxu0
        %v679 = vadd.f32 %v594, %v678
        %v680 = vpop.f32.mrf.mxu0
        %v681 = vadd.f32 %v594, %v680
        %682 = vmatmul.bf16.gmra.mxu0 %v574
        %v683 = vpop.f32.mrf.mxu0
        %v684 = vadd.f32 %v594, %v683
        %v685 = vpop.f32.mrf.mxu0
        %v686 = vadd.f32 %v594, %v685
        %687 = vmatmul.bf16.gmra.mxu0 %v575
        %v688 = vpop.f32.mrf.mxu0
        %v689 = vadd.f32 %v594, %v688
        %v690 = vpop.f32.mrf.mxu0
        %v691 = vadd.f32 %v594, %v690
        %692 = vdwg.mxu0
        %v693 = vmax.f32 %v654, 0.0
        %v694 = vmax.f32 %v656, 0.0
        %v695 = vmax.f32 %v659, 0.0
        %v696 = vmax.f32 %v661, 0.0
        %v697 = vmax.f32 %v664, 0.0
        %v698 = vmax.f32 %v666, 0.0
        %v699 = vmax.f32 %v669, 0.0
        %v700 = vmax.f32 %v671, 0.0
        %v701 = vmax.f32 %v674, 0.0
        %v702 = vmax.f32 %v676, 0.0
        %v703 = vmax.f32 %v679, 0.0
        %v704 = vmax.f32 %v681, 0.0
        %v705 = vmax.f32 %v684, 0.0
        %v706 = vmax.f32 %v686, 0.0
        %v707 = vmax.f32 %v689, 0.0
        %v708 = vmax.f32 %v691, 0.0
        %v709 = vpack.c.bf16 %v694, %v693
        %v710 = vpack.c.bf16 %v696, %v695
        %v711 = vpack.c.bf16 %v698, %v697
        %v712 = vpack.c.bf16 %v700, %v699
        %v713 = vpack.c.bf16 %v702, %v701
        %v714 = vpack.c.bf16 %v704, %v703
        %v715 = vpack.c.bf16 %v706, %v705
        %v716 = vpack.c.bf16 %v708, %v707
        %v717 = vld [vmem:[#allocation10] sm:$0xf]
        %v718 = vld [vmem:[#allocation10 + $0x4] sm:$0xf]
        %v719 = vld [vmem:[#allocation10 + $0x8] sm:$0xf]
        %v720 = vld [vmem:[#allocation10 + $0xc] sm:$0xf]
        %v721 = vld [vmem:[#allocation10 + $0x10] sm:$0xf]
        %v722 = vld [vmem:[#allocation10 + $0x14] sm:$0xf]
        %v723 = vld [vmem:[#allocation10 + $0x18] sm:$0xf]
        %v724 = vld [vmem:[#allocation10 + $0x1c] sm:$0xf]
        %v725 = vld [vmem:[#allocation10 + $0x20] sm:$0xf]
        %v726 = vld [vmem:[#allocation10 + $0x24] sm:$0xf]
        %v727 = vld [vmem:[#allocation10 + $0x28] sm:$0xf]
        %v728 = vld [vmem:[#allocation10 + $0x2c] sm:$0xf]
        %v729 = vld [vmem:[#allocation10 + $0x30] sm:$0xf]
        %v730 = vld [vmem:[#allocation10 + $0x34] sm:$0xf]
        %v731 = vld [vmem:[#allocation10 + $0x38] sm:$0xf]
        %v732 = vld [vmem:[#allocation10 + $0x3c] sm:$0xf]
        %v733 = vld [vmem:[%s6] sm:$0x1]
        %v735 = vperm.slane %v733, 0
        %v753 = vunpack.c.l.b16 %v717
        %v754 = vunpack.c.l.b16 %v718
        %v755 = vunpack.c.l.b16 %v719
        %v756 = vunpack.c.l.b16 %v720
        %v757 = vunpack.c.l.b16 %v721
        %v758 = vunpack.c.l.b16 %v722
        %v759 = vunpack.c.l.b16 %v723
        %v760 = vunpack.c.l.b16 %v724
        %v761 = vunpack.c.l.b16 %v725
        %v762 = vunpack.c.l.b16 %v726
        %v763 = vunpack.c.l.b16 %v727
        %v764 = vunpack.c.l.b16 %v728
        %v765 = vunpack.c.l.b16 %v729
        %v766 = vunpack.c.l.b16 %v730
        %v767 = vunpack.c.l.b16 %v731
        %v768 = vunpack.c.l.b16 %v732
        %v769 = vpack.c.b16 %v754, %v753
        %v770 = vpack.c.b16 %v756, %v755
        %v771 = vpack.c.b16 %v758, %v757
        %v772 = vpack.c.b16 %v760, %v759
        %v773 = vpack.c.b16 %v762, %v761
        %v774 = vpack.c.b16 %v764, %v763
        %v775 = vpack.c.b16 %v766, %v765
        %v776 = vpack.c.b16 %v768, %v767
        %785 = vmatpush.bf16.msra.mxu0 %v776
        %786 = vmatpush.bf16.msra.mxu0 %v775
        %787 = vmatpush.bf16.msra.mxu0 %v774
        %788 = vmatpush.bf16.msra.mxu0 %v773
        %789 = vmatpush.bf16.msra.mxu0 %v772
        %790 = vmatpush.bf16.msra.mxu0 %v771
        %791 = vmatpush.bf16.msra.mxu0 %v770
        %792 = vmatpush.bf16.msra.mxu0 %v769
        %793 = vmatmul.bf16.gmra.mxu0 %v709
        %v794 = vpop.f32.mrf.mxu0
        %v795 = vadd.f32 %v735, %v794
        %v796 = vpop.f32.mrf.mxu0
        %v797 = vadd.f32 %v735, %v796
        %798 = vmatmul.bf16.gmra.mxu0 %v710
        %v799 = vpop.f32.mrf.mxu0
        %v800 = vadd.f32 %v735, %v799
        %v801 = vpop.f32.mrf.mxu0
        %v802 = vadd.f32 %v735, %v801
        %803 = vmatmul.bf16.gmra.mxu0 %v711
        %v804 = vpop.f32.mrf.mxu0
        %v805 = vadd.f32 %v735, %v804
        %v806 = vpop.f32.mrf.mxu0
        %v807 = vadd.f32 %v735, %v806
        %808 = vmatmul.bf16.gmra.mxu0 %v712
        %v809 = vpop.f32.mrf.mxu0
        %v810 = vadd.f32 %v735, %v809
        %v811 = vpop.f32.mrf.mxu0
        %v812 = vadd.f32 %v735, %v811
        %813 = vmatmul.bf16.gmra.mxu0 %v713
        %v814 = vpop.f32.mrf.mxu0
        %v815 = vadd.f32 %v735, %v814
        %v816 = vpop.f32.mrf.mxu0
        %v817 = vadd.f32 %v735, %v816
        %818 = vmatmul.bf16.gmra.mxu0 %v714
        %v819 = vpop.f32.mrf.mxu0
        %v820 = vadd.f32 %v735, %v819
        %v821 = vpop.f32.mrf.mxu0
        %v822 = vadd.f32 %v735, %v821
        %823 = vmatmul.bf16.gmra.mxu0 %v715
        %v824 = vpop.f32.mrf.mxu0
        %v825 = vadd.f32 %v735, %v824
        %v826 = vpop.f32.mrf.mxu0
        %v827 = vadd.f32 %v735, %v826
        %828 = vmatmul.bf16.gmra.mxu0 %v716
        %v829 = vpop.f32.mrf.mxu0
        %v830 = vadd.f32 %v735, %v829
        %v831 = vpop.f32.mrf.mxu0
        %v832 = vadd.f32 %v735, %v831
        %833 = vdwg.mxu0
        %v834 = vmax.f32 %v795, 0.0
        %v835 = vmax.f32 %v797, 0.0
        %v836 = vmax.f32 %v800, 0.0
        %v837 = vmax.f32 %v802, 0.0
        %v838 = vmax.f32 %v805, 0.0
        %v839 = vmax.f32 %v807, 0.0
        %v840 = vmax.f32 %v810, 0.0
        %v841 = vmax.f32 %v812, 0.0
        %v842 = vmax.f32 %v815, 0.0
        %v843 = vmax.f32 %v817, 0.0
        %v844 = vmax.f32 %v820, 0.0
        %v845 = vmax.f32 %v822, 0.0
        %v846 = vmax.f32 %v825, 0.0
        %v847 = vmax.f32 %v827, 0.0
        %v848 = vmax.f32 %v830, 0.0
        %v849 = vmax.f32 %v832, 0.0
        %v850 = vpack.c.bf16 %v835, %v834
        %v851 = vpack.c.bf16 %v837, %v836
        %v852 = vpack.c.bf16 %v839, %v838
        %v853 = vpack.c.bf16 %v841, %v840
        %v854 = vpack.c.bf16 %v843, %v842
        %v855 = vpack.c.bf16 %v845, %v844
        %v856 = vpack.c.bf16 %v847, %v846
        %v857 = vpack.c.bf16 %v849, %v848
        %v858 = vld [vmem:[#allocation11] sm:$0xf]
        %v859 = vld [vmem:[#allocation11 + $0x4] sm:$0xf]
        %v860 = vld [vmem:[#allocation11 + $0x8] sm:$0xf]
        %v861 = vld [vmem:[#allocation11 + $0xc] sm:$0xf]
        %v862 = vld [vmem:[#allocation11 + $0x10] sm:$0xf]
        %v863 = vld [vmem:[#allocation11 + $0x14] sm:$0xf]
        %v864 = vld [vmem:[#allocation11 + $0x18] sm:$0xf]
        %v865 = vld [vmem:[#allocation11 + $0x1c] sm:$0xf]
        %v866 = vld [vmem:[#allocation11 + $0x20] sm:$0xf]
        %v867 = vld [vmem:[#allocation11 + $0x24] sm:$0xf]
        %v868 = vld [vmem:[#allocation11 + $0x28] sm:$0xf]
        %v869 = vld [vmem:[#allocation11 + $0x2c] sm:$0xf]
        %v870 = vld [vmem:[#allocation11 + $0x30] sm:$0xf]
        %v871 = vld [vmem:[#allocation11 + $0x34] sm:$0xf]
        %v872 = vld [vmem:[#allocation11 + $0x38] sm:$0xf]
        %v873 = vld [vmem:[#allocation11 + $0x3c] sm:$0xf]
        %v874 = vld [vmem:[%s8] sm:$0x1]
        %v876 = vperm.slane %v874, 0
        %v894 = vunpack.c.l.b16 %v858
        %v895 = vunpack.c.l.b16 %v859
        %v896 = vunpack.c.l.b16 %v860
        %v897 = vunpack.c.l.b16 %v861
        %v898 = vunpack.c.l.b16 %v862
        %v899 = vunpack.c.l.b16 %v863
        %v900 = vunpack.c.l.b16 %v864
        %v901 = vunpack.c.l.b16 %v865
        %v902 = vunpack.c.l.b16 %v866
        %v903 = vunpack.c.l.b16 %v867
        %v904 = vunpack.c.l.b16 %v868
        %v905 = vunpack.c.l.b16 %v869
        %v906 = vunpack.c.l.b16 %v870
        %v907 = vunpack.c.l.b16 %v871
        %v908 = vunpack.c.l.b16 %v872
        %v909 = vunpack.c.l.b16 %v873
        %v910 = vpack.c.b16 %v895, %v894
        %v911 = vpack.c.b16 %v897, %v896
        %v912 = vpack.c.b16 %v899, %v898
        %v913 = vpack.c.b16 %v901, %v900
        %v914 = vpack.c.b16 %v903, %v902
        %v915 = vpack.c.b16 %v905, %v904
        %v916 = vpack.c.b16 %v907, %v906
        %v917 = vpack.c.b16 %v909, %v908
        %926 = vmatpush.bf16.msra.mxu0 %v917
        %927 = vmatpush.bf16.msra.mxu0 %v916
        %928 = vmatpush.bf16.msra.mxu0 %v915
        %929 = vmatpush.bf16.msra.mxu0 %v914
        %930 = vmatpush.bf16.msra.mxu0 %v913
        %931 = vmatpush.bf16.msra.mxu0 %v912
        %932 = vmatpush.bf16.msra.mxu0 %v911
        %933 = vmatpush.bf16.msra.mxu0 %v910
        %934 = vmatmul.bf16.gmra.mxu0 %v850
        %v935 = vpop.f32.mrf.mxu0
        %v936 = vadd.f32 %v876, %v935
        %v937 = vpop.f32.mrf.mxu0
        %v938 = vadd.f32 %v876, %v937
        %939 = vmatmul.bf16.gmra.mxu0 %v851
        %v940 = vpop.f32.mrf.mxu0
        %v941 = vadd.f32 %v876, %v940
        %v942 = vpop.f32.mrf.mxu0
        %v943 = vadd.f32 %v876, %v942
        %944 = vmatmul.bf16.gmra.mxu0 %v852
        %v945 = vpop.f32.mrf.mxu0
        %v946 = vadd.f32 %v876, %v945
        %v947 = vpop.f32.mrf.mxu0
        %v948 = vadd.f32 %v876, %v947
        %949 = vmatmul.bf16.gmra.mxu0 %v853
        %v950 = vpop.f32.mrf.mxu0
        %v951 = vadd.f32 %v876, %v950
        %v952 = vpop.f32.mrf.mxu0
        %v953 = vadd.f32 %v876, %v952
        %954 = vmatmul.bf16.gmra.mxu0 %v854
        %v955 = vpop.f32.mrf.mxu0
        %v956 = vadd.f32 %v876, %v955
        %v957 = vpop.f32.mrf.mxu0
        %v958 = vadd.f32 %v876, %v957
        %959 = vmatmul.bf16.gmra.mxu0 %v855
        %v960 = vpop.f32.mrf.mxu0
        %v961 = vadd.f32 %v876, %v960
        %v962 = vpop.f32.mrf.mxu0
        %v963 = vadd.f32 %v876, %v962
        %964 = vmatmul.bf16.gmra.mxu0 %v856
        %v965 = vpop.f32.mrf.mxu0
        %v966 = vadd.f32 %v876, %v965
        %v967 = vpop.f32.mrf.mxu0
        %v968 = vadd.f32 %v876, %v967
        %969 = vmatmul.bf16.gmra.mxu0 %v857
        %v970 = vpop.f32.mrf.mxu0
        %v971 = vadd.f32 %v876, %v970
        %v972 = vpop.f32.mrf.mxu0
        %v973 = vadd.f32 %v876, %v972
        %974 = vdwg.mxu0
        %v975 = vmax.f32 %v936, 1e-06
        %v976 = vmax.f32 %v938, 1e-06
        %v977 = vmax.f32 %v941, 1e-06
        %v978 = vmax.f32 %v943, 1e-06
        %v979 = vmax.f32 %v946, 1e-06
        %v980 = vmax.f32 %v948, 1e-06
        %v981 = vmax.f32 %v951, 1e-06
        %v982 = vmax.f32 %v953, 1e-06
        %v983 = vmax.f32 %v956, 1e-06
        %v984 = vmax.f32 %v958, 1e-06
        %v985 = vmax.f32 %v961, 1e-06
        %v986 = vmax.f32 %v963, 1e-06
        %v987 = vmax.f32 %v966, 1e-06
        %v988 = vmax.f32 %v968, 1e-06
        %v989 = vmax.f32 %v971, 1e-06
        %v990 = vmax.f32 %v973, 1e-06
        %v991 = vmin.f32 %v975, 0.999999
        %v992 = vmin.f32 %v976, 0.999999
        %v993 = vmin.f32 %v977, 0.999999
        %v994 = vmin.f32 %v978, 0.999999
        %v995 = vmin.f32 %v979, 0.999999
        %v996 = vmin.f32 %v980, 0.999999
        %v997 = vmin.f32 %v981, 0.999999
        %v998 = vmin.f32 %v982, 0.999999
        %v999 = vmin.f32 %v983, 0.999999
        %v1000 = vmin.f32 %v984, 0.999999
        %v1001 = vmin.f32 %v985, 0.999999
        %v1002 = vmin.f32 %v986, 0.999999
        %v1003 = vmin.f32 %v987, 0.999999
        %v1004 = vmin.f32 %v988, 0.999999
        %v1005 = vmin.f32 %v989, 0.999999
        %v1006 = vmin.f32 %v990, 0.999999
        %1007 = vst [vmem:[%s483] sm:$0xff] %v991
        %1008 = vst [vmem:[%s483 + $0x8] sm:$0xff] %v992
        %1009 = vst [vmem:[%s483 + $0x10] sm:$0xff] %v993
        %1010 = vst [vmem:[%s483 + $0x18] sm:$0xff] %v994
        %1011 = vst [vmem:[%s483 + $0x20] sm:$0xff] %v995
        %1012 = vst [vmem:[%s483 + $0x28] sm:$0xff] %v996
        %1013 = vst [vmem:[%s483 + $0x30] sm:$0xff] %v997
        %1014 = vst [vmem:[%s483 + $0x38] sm:$0xff] %v998
        %1015 = vst [vmem:[%s483 + $0x40] sm:$0xff] %v999
        %1016 = vst [vmem:[%s483 + $0x48] sm:$0xff] %v1000
        %1017 = vst [vmem:[%s483 + $0x50] sm:$0xff] %v1001
        %1018 = vst [vmem:[%s483 + $0x58] sm:$0xff] %v1002
        %1019 = vst [vmem:[%s483 + $0x60] sm:$0xff] %v1003
        %1020 = vst [vmem:[%s483 + $0x68] sm:$0xff] %v1004
        %1021 = vst [vmem:[%s483 + $0x70] sm:$0xff] %v1005
        %1022 = vst [vmem:[%s483 + $0x78] sm:$0xff] %v1006
        %s1023 = sand.u32 %s243, 1
        %s1024 = scalar_lea.sflag [#allocation4], %s1023
        %s1025 = sand.u32 %s243, 1
        %s1026 = smul.addr %s1025, 128
        %s1027 = scalar_lea.vmem [#allocation13], %s1026
        // Predicated region
        $region81: #{tpu_custom_call.1} parent=55 // pred_check
          %p1028 = pneg %p253
        $region82: #{tpu_custom_call.1} parent=55 // pred_check_branch
          %1030 = sbr.rel (%p1028) target = $region84
        $region83: #{tpu_custom_call.1} parent=55 // pred_region
          %s1031 = smul.u32 16, %s31
          %1033 = vsyncadd %s1024, 0
          %s1034 = smul.addr %s1031, 8
          %s1035 = scalar_lea.hbm %s9, %s1034
          %s1036 = sshll.u32 %s1027, 4
          %s1037 = int_to_ptr.vmem [resolvable:$true] %s1036
          %s1038 = sshll.u32 %s1035, 4
          %s1039 = int_to_ptr.hbm [resolvable:$true] %s1038
          %1044 = dma.vmem_to_hbm [thread:$0]  %s1037, 2048, %s1039, %s1024, 128, 128, 8
        $region84: #{tpu_custom_call.1} parent=55 // pred_fallthru
          _
      $region56: #{tpu_custom_call.1} parent=5 // pred_fallthru
        _
      %p1045 = scmp.le.s32.totalorder 2, %s26
      // Predicated region
      $region85: #{tpu_custom_call.1} parent=5 // pred_check
        %p1046 = pneg %p1045
      $region86: #{tpu_custom_call.1} parent=5 // pred_check_branch
        %1048 = sbr.rel (%p1046) target = $region88
      $region87: #{tpu_custom_call.1} parent=5 // pred_region
        %s1049 = ssub.s32 %s26, 2
        // Predicated region
        $region89: #{tpu_custom_call.1} parent=87 // pred_check
          %p1050 = pneg %p259
        $region90: #{tpu_custom_call.1} parent=87 // pred_check_branch
          %1052 = sbr.rel (%p1050) target = $region92
        $region91: #{tpu_custom_call.1} parent=87 // pred_region
          %s1053 = sand.u32 %s244, 1
          %s1054 = scalar_lea.sflag [#allocation4], %s1053
          %s1055 = sand.u32 %s244, 1
          %s1056 = smul.addr %s1055, 128
          %s1057 = scalar_lea.vmem [#allocation13], %s1056
          %1059 = dma.done %s1054, 2048
        $region92: #{tpu_custom_call.1} parent=87 // pred_fallthru
          _
      $region88: #{tpu_custom_call.1} parent=5 // pred_fallthru
        _
    $region6: #{tpu_custom_call.1} parent=1 // loop_footer
      %s30 = sadd.s32 1, %s26
    $region7: #{tpu_custom_call.1} parent=1 // loop_footer_branch
      %25 = sbr.rel target = $region3
    $region8: #{tpu_custom_call.1} parent=1 // loop_exit
      _
    %1060 = vsyncpa [#allocation3], 1
    %s1061 = scalar_lea.sflag [#allocation3], 1
    %1062 = vsyncpa %s1061, 1
    %1063 = vsyncpa [#allocation6], 1
    %s1064 = scalar_lea.sflag [#allocation6], 1
    %1065 = vsyncpa %s1064, 1
    %1066 = vsyncpa [#allocation9], 1
    %1067 = vsyncpa [#allocation12], 1
    %1068 = vsyncpa [#allocation4], 1
    %s1069 = scalar_lea.sflag [#allocation4], 1
    %1070 = vsyncpa %s1069, 1

</llo_original>
